<compile_context>
chip_gen: v5e
topology: v5e:2x2
jax: 0.10.0
libtpu: 0.0.40
codegen_flags: <defaults>
</compile_context>

<pallas_src>
import jax
import jax.numpy as jnp
from jax.experimental import pallas as pl
from jax.experimental.pallas import tpu as pltpu  # noqa: F401  (TPU backend)

LANE = 128  # lane width; output-feature dim is padded to this


# ---------------------------------------------------------------------------
# Fused Pallas kernel: out = (relu(x @ W1 + b1)) @ W2 + b2
#   x   : (N, D_in)      f32  (cast to bf16 in-kernel for the MXU)
#   W1  : (D_in, H)      bf16
#   b1  : (1, H)         f32
#   W2  : (H, 128)       bf16 (zero-padded past d_out)
#   b2  : (1, 128)       f32  (zero-padded past d_out)
#   out : (N, 128)       f32
# ---------------------------------------------------------------------------
def _fused_mlp_kernel(x_ref, w1_ref, b1_ref, w2_ref, b2_ref, o_ref):
    # In-kernel cast of the activations (VPU, tiny tile, effectively free).
    x = x_ref[...].astype(jnp.bfloat16)
    # Layer 1: bf16 MXU matmul, f32 accumulate, f32 bias + ReLU epilogue.
    h = jnp.dot(x, w1_ref[...], preferred_element_type=jnp.float32)
    h = jnp.maximum(h + b1_ref[...], 0.0)          # (N, H), stays f32 on-chip
    # Layer 2: keep h in f32 (parity with PyTorch); W2 streamed bf16, up-cast
    # in vregs so HBM traffic stays halved.
    y = jnp.dot(h, w2_ref[...].astype(jnp.float32),
                preferred_element_type=jnp.float32)
    o_ref[...] = (y + b2_ref[...]).astype(o_ref.dtype)


def mlp_forward(x_nchw, params):
    """params: ((W1, b1), (W2, b2)); W1 (d_in, hidden) bf16, W2 (hidden, d_out) bf16."""
    (w1, b1), (w2, b2) = params
    n = x_nchw.shape[0]
    x = x_nchw.reshape(n, -1)                        # nn.Flatten(), stays f32
    d_in, hidden = w1.shape
    d_out = w2.shape[1]

    # Lane-pad the narrow output dim to 128 for a dense W2 DMA / unmasked store.
    n_pad = LANE
    w2_p = jnp.zeros((hidden, n_pad), jnp.bfloat16).at[:, :d_out].set(w2)
    b2_p = jnp.zeros((1, n_pad), jnp.float32).at[0, :d_out].set(
        b2.astype(jnp.float32))
    b1_2 = b1.reshape(1, hidden).astype(jnp.float32)

    flops = 2 * n * (d_in * hidden + hidden * n_pad)
    bytes_accessed = (x.size * 4 + w1.size * 2 + b1_2.size * 4
                      + w2_p.size * 2 + b2_p.size * 4 + n * n_pad * 4)

    out_padded = pl.pallas_call(
        _fused_mlp_kernel,
        out_shape=jax.ShapeDtypeStruct((n, n_pad), jnp.float32),
        in_specs=[
            pl.BlockSpec((n, d_in), lambda: (0, 0)),
            pl.BlockSpec((d_in, hidden), lambda: (0, 0)),
            pl.BlockSpec((1, hidden), lambda: (0, 0)),
            pl.BlockSpec((hidden, n_pad), lambda: (0, 0)),
            pl.BlockSpec((1, n_pad), lambda: (0, 0)),
        ],
        out_specs=pl.BlockSpec((n, n_pad), lambda: (0, 0)),
        cost_estimate=pl.CostEstimate(
            flops=flops, transcendentals=0, bytes_accessed=bytes_accessed),
    )(x, w1, b1_2, w2_p, b2_p)

    return out_padded[:, :d_out]


# ---------------------------------------------------------------------------
# Parameter init (mirrors MLP._initialize_weights: Kaiming normal, fan_out,
# relu gain -> std = sqrt(2 / out_features); zero biases).
# ---------------------------------------------------------------------------
def init_mlp_params(key, input_dim, hidden_dim, output_dim):
    k1, k2 = jax.random.split(key)
    std1 = (2.0 / hidden_dim) ** 0.5
    std2 = (2.0 / output_dim) ** 0.5
    # Stored as (in, out) = transpose of the PyTorch layout; bf16 for streaming.
    w1 = (jax.random.normal(k1, (input_dim, hidden_dim), jnp.float32) * std1
          ).astype(jnp.bfloat16)
    b1 = jnp.zeros((hidden_dim,), jnp.float32)
    w2 = (jax.random.normal(k2, (hidden_dim, output_dim), jnp.float32) * std2
          ).astype(jnp.bfloat16)
    b2 = jnp.zeros((output_dim,), jnp.float32)
    return ((w1, b1), (w2, b2))


if __name__ == "__main__":
    # Example hidden_layers (OrderedDict):
    #   fc1: Linear(input_dim, 256), act1: ReLU(), fc2: Linear(256, output_dim)
    batch, C, H, W = 2, 4, 16, 16
    input_dim = C * H * W            # 1024 (what nn.Flatten produces)
    hidden_dim = 256
    output_dim = 32

    key = jax.random.PRNGKey(0)
    kx, kp = jax.random.split(key)
    x = jax.random.normal(kx, (batch, C, H, W), jnp.float32)
    params = init_mlp_params(kp, input_dim, hidden_dim, output_dim)

    out = mlp_forward(x, params)
    out = jax.block_until_ready(out)

    # Reference in plain JAX with matching (bf16 operand, f32 accumulate) math.
    (w1, b1), (w2, b2) = params
    xf = x.reshape(batch, -1).astype(jnp.bfloat16).astype(jnp.float32)
    h_ref = jnp.maximum(xf @ w1.astype(jnp.float32) + b1, 0.0)
    ref = h_ref @ w2.astype(jnp.float32) + b2

    assert out.shape == (batch, output_dim)
    assert jnp.allclose(out, ref, atol=2e-2, rtol=2e-2)

    print("KERNEL_OK")
</pallas_src>

<mosaic_0001>
module attributes {stable_mosaic.version = 11 : i64} {
  func.func @_fused_mlp_kernel(%arg0: memref<2x1024xf32, #tpu.memory_space<vmem>>, %arg1: memref<1024x256xbf16, #tpu.memory_space<vmem>>, %arg2: memref<1x256xf32, #tpu.memory_space<vmem>>, %arg3: memref<256x128xbf16, #tpu.memory_space<vmem>>, %arg4: memref<1x128xf32, #tpu.memory_space<vmem>>, %arg5: memref<2x128xf32, #tpu.memory_space<vmem>>) attributes {dimension_semantics = [], scalar_prefetch = 0 : i64, scratch_operands = 0 : i64, tpu.core_type = #tpu.core_type<tc>} {
    %c0 = arith.constant 0 : index
    %c0_0 = arith.constant 0 : index
    %0 = vector.load %arg0[%c0, %c0_0] : memref<2x1024xf32, #tpu.memory_space<vmem>>, vector<2x1024xf32>
    %1 = arith.truncf %0 : vector<2x1024xf32> to vector<2x1024xbf16>
    %c0_1 = arith.constant 0 : index
    %c0_2 = arith.constant 0 : index
    %2 = vector.load %arg1[%c0_1, %c0_2] : memref<1024x256xbf16, #tpu.memory_space<vmem>>, vector<1024x256xbf16>
    %cst = arith.constant dense<0.000000e+00> : vector<2x256xf32>
    %3 = tpu.matmul %1, %2, %cst {dimension_numbers = #tpu.dot_dimension_numbers<[1], [0], [0], [1], [0, 0, 1, 1], [], []>} : vector<2x1024xbf16>, vector<1024x256xbf16>, vector<2x256xf32> -> vector<2x256xf32>
    %c0_3 = arith.constant 0 : index
    %c0_4 = arith.constant 0 : index
    %4 = vector.load %arg2[%c0_3, %c0_4] : memref<1x256xf32, #tpu.memory_space<vmem>>, vector<1x256xf32>
    %5 = vector.broadcast %4 : vector<1x256xf32> to vector<2x256xf32>
    %6 = arith.addf %3, %5 : vector<2x256xf32>
    %cst_5 = arith.constant 0.000000e+00 : f32
    %7 = vector.broadcast %cst_5 : f32 to vector<2x256xf32>
    %8 = arith.maximumf %6, %7 : vector<2x256xf32>
    %c0_6 = arith.constant 0 : index
    %c0_7 = arith.constant 0 : index
    %9 = vector.load %arg3[%c0_6, %c0_7] : memref<256x128xbf16, #tpu.memory_space<vmem>>, vector<256x128xbf16>
    %10 = arith.extf %9 : vector<256x128xbf16> to vector<256x128xf32>
    %cst_8 = arith.constant dense<0.000000e+00> : vector<2x128xf32>
    %11 = tpu.matmul %8, %10, %cst_8 {dimension_numbers = #tpu.dot_dimension_numbers<[1], [0], [0], [1], [0, 0, 1, 1], [], []>} : vector<2x256xf32>, vector<256x128xf32>, vector<2x128xf32> -> vector<2x128xf32>
    %c0_9 = arith.constant 0 : index
    %c0_10 = arith.constant 0 : index
    %12 = vector.load %arg4[%c0_9, %c0_10] : memref<1x128xf32, #tpu.memory_space<vmem>>, vector<1x128xf32>
    %13 = vector.broadcast %12 : vector<1x128xf32> to vector<2x128xf32>
    %14 = arith.addf %11, %13 : vector<2x128xf32>
    %c0_11 = arith.constant 0 : index
    %c0_12 = arith.constant 0 : index
    %15 = vector.load %arg5[%c0_11, %c0_12] : memref<2x128xf32, #tpu.memory_space<vmem>>, vector<2x128xf32>
    tpu.vector_store %arg5[%c0_11, %c0_12], %14 {strides = array<i32>} : memref<2x128xf32, #tpu.memory_space<vmem>>, vector<2x128xf32>,
    return
  }
}

</mosaic_0001>

<llo_original>
// kernel: tpu_custom_call.1
$region0: #{tpu_custom_call.1}
  #allocation0 [shape = 'u32[]', space=smem, size = 0x4, offset = 0x4, fixed_abs, tag = 'smem constant byte address 0x4 - core index']
  #allocation1 [shape = 'u32[72,128]{1,0:T(1,128)}', space=vmem, size = 0x9000, scoped, tag = 'internal scratch']
  %s0 = inlined_call_operand.hbm [shape: f32[2,1024], index: 0, kind: input, shape index: {}]
  %s1 = inlined_call_operand.hbm [shape: bf16[1024,256], index: 1, kind: input, shape index: {}]
  %s2 = inlined_call_operand.hbm [shape: f32[1,256], index: 2, kind: input, shape index: {}]
  %s3 = inlined_call_operand.hbm [shape: bf16[256,128], index: 3, kind: input, shape index: {}]
  %s4 = inlined_call_operand.vmem [shape: f32[1,128], index: 4, kind: input, shape index: {}]
  %s5 = inlined_call_operand.hbm [shape: f32[2,128], index: 5, kind: output, shape index: {}]
  %s6 = sld [smem:[#allocation0]]
  $region46: #{tpu_custom_call.1} parent=0
    _
  %s8 = ssub.s32 1, %s6
  %s9 = scalar_select 0, %s8, %s6
  $region1: #{tpu_custom_call.1} parent=0
    #allocation2 [shape = 'u8[8192]{0}', space=vmem, size = 0x2000, scoped, tag = 'input window, operand 0, single buffered']
    #allocation3 [shape = 's32[1]{0}', space=sflag, size = 0x4, scoped, tag = 'scoped memory for tpu_custom_call.1']
    #allocation4 [shape = 's32[1]{0}', space=sflag, size = 0x4, scoped, tag = 'scoped memory for tpu_custom_call.1']
    #allocation5 [shape = 'u8[524288]{0}', space=vmem, size = 0x80000, scoped, tag = 'input window, operand 1, single buffered']
    #allocation6 [shape = 's32[1]{0}', space=sflag, size = 0x4, scoped, tag = 'scoped memory for tpu_custom_call.1']
    #allocation7 [shape = 'u8[1024]{0}', space=vmem, size = 0x400, scoped, tag = 'input window, operand 2, single buffered']
    #allocation8 [shape = 'u8[65536]{0}', space=vmem, size = 0x10000, scoped, tag = 'input window, operand 3, single buffered']
    #allocation9 [shape = 's32[1]{0}', space=sflag, size = 0x4, scoped, tag = 'scoped memory for tpu_custom_call.1']
    #allocation10 [shape = 'u8[1024]{0}', space=vmem, size = 0x400, scoped, tag = 'output window, operand 0, single buffered']
    %10 = vsyncpa [#allocation3], 0
    %11 = vsyncpa [#allocation6], 0
    %12 = vsyncpa [#allocation9], 0
    %13 = vsyncpa [#allocation4], 0
    // Predicated region
    $region2: #{tpu_custom_call.1} parent=1 // pred_check
      _
    $region3: #{tpu_custom_call.1} parent=1 // pred_check_branch
      %15 = sbr.rel (0) target = $region5
    $region4: #{tpu_custom_call.1} parent=1 // pred_region
      %17 = vsyncadd [#allocation3], 0
      %s19 = sshll.u32 %s0, 4
      %s20 = int_to_ptr.hbm [resolvable:$true] %s19
      %s21 = sshll.u32 [#allocation2], 4
      %s22 = int_to_ptr.vmem [resolvable:$true] %s21
      %24 = dma.hbm_to_vmem [thread:$0]  %s20, 256, %s22, [#allocation3]
    $region5: #{tpu_custom_call.1} parent=1 // pred_fallthru
      _
    // Predicated region
    $region6: #{tpu_custom_call.1} parent=1 // pred_check
      _
    $region7: #{tpu_custom_call.1} parent=1 // pred_check_branch
      %26 = sbr.rel (0) target = $region9
    $region8: #{tpu_custom_call.1} parent=1 // pred_region
      %28 = vsyncadd [#allocation6], 0
      %s29 = sshll.u32 %s1, 4
      %s30 = int_to_ptr.hbm [resolvable:$true] %s29
      %s31 = sshll.u32 [#allocation5], 4
      %s32 = int_to_ptr.vmem [resolvable:$true] %s31
      %37 = dma.hbm_to_vmem [thread:$0]  %s30, 16384, %s32, [#allocation6], 128, 128, 8
    $region9: #{tpu_custom_call.1} parent=1 // pred_fallthru
      _
    // Predicated region
    $region10: #{tpu_custom_call.1} parent=1 // pred_check
      _
    $region11: #{tpu_custom_call.1} parent=1 // pred_check_branch
      %39 = sbr.rel (0) target = $region13
    $region12: #{tpu_custom_call.1} parent=1 // pred_region
      %41 = vsyncadd [#allocation6], 0
      %s43 = sshll.u32 %s2, 4
      %s44 = int_to_ptr.hbm [resolvable:$true] %s43
      %s45 = sshll.u32 [#allocation7], 4
      %s46 = int_to_ptr.vmem [resolvable:$true] %s45
      %48 = dma.hbm_to_vmem [thread:$0]  %s44, 32, %s46, [#allocation6]
    $region13: #{tpu_custom_call.1} parent=1 // pred_fallthru
      _
    // Predicated region
    $region14: #{tpu_custom_call.1} parent=1 // pred_check
      _
    $region15: #{tpu_custom_call.1} parent=1 // pred_check_branch
      %50 = sbr.rel (0) target = $region17
    $region16: #{tpu_custom_call.1} parent=1 // pred_region
      %52 = vsyncadd [#allocation9], 0
      %s53 = sshll.u32 %s3, 4
      %s54 = int_to_ptr.hbm [resolvable:$true] %s53
      %s55 = sshll.u32 [#allocation8], 4
      %s56 = int_to_ptr.vmem [resolvable:$true] %s55
      %61 = dma.hbm_to_vmem [thread:$0]  %s54, 2048, %s56, [#allocation9], 64, 64, 4
    $region17: #{tpu_custom_call.1} parent=1 // pred_fallthru
      _
    // Predicated region
    $region18: #{tpu_custom_call.1} parent=1 // pred_check
      _
    $region19: #{tpu_custom_call.1} parent=1 // pred_check_branch
      %63 = sbr.rel (0) target = $region21
    $region20: #{tpu_custom_call.1} parent=1 // pred_region
      _
    $region21: #{tpu_custom_call.1} parent=1 // pred_fallthru
      _
    // Predicated region
    $region22: #{tpu_custom_call.1} parent=1 // pred_check
      _
    $region23: #{tpu_custom_call.1} parent=1 // pred_check_branch
      %65 = sbr.rel (0) target = $region25
    $region24: #{tpu_custom_call.1} parent=1 // pred_region
      %67 = dma.done [#allocation3], 256
    $region25: #{tpu_custom_call.1} parent=1 // pred_fallthru
      _
    // Predicated region
    $region26: #{tpu_custom_call.1} parent=1 // pred_check
      _
    $region27: #{tpu_custom_call.1} parent=1 // pred_check_branch
      %69 = sbr.rel (0) target = $region29
    $region28: #{tpu_custom_call.1} parent=1 // pred_region
      %71 = dma.done [#allocation6], 16384
    $region29: #{tpu_custom_call.1} parent=1 // pred_fallthru
      _
    // Predicated region
    $region30: #{tpu_custom_call.1} parent=1 // pred_check
      _
    $region31: #{tpu_custom_call.1} parent=1 // pred_check_branch
      %73 = sbr.rel (0) target = $region33
    $region32: #{tpu_custom_call.1} parent=1 // pred_region
      %75 = dma.done [#allocation6], 32
    $region33: #{tpu_custom_call.1} parent=1 // pred_fallthru
      _
    // Predicated region
    $region34: #{tpu_custom_call.1} parent=1 // pred_check
      _
    $region35: #{tpu_custom_call.1} parent=1 // pred_check_branch
      %77 = sbr.rel (0) target = $region37
    $region36: #{tpu_custom_call.1} parent=1 // pred_region
      %79 = dma.done [#allocation9], 2048
    $region37: #{tpu_custom_call.1} parent=1 // pred_fallthru
      _
    %v80 = vld [vmem:[#allocation2] sm:$0xff]
    %v81 = vld [vmem:[#allocation2 + $0x8] sm:$0xff]
    %84 = vst [vmem:[#allocation1] ss:$4 sm:$0xff] %v80
    %s85 = scalar_lea.vmem [#allocation1], 32
    %86 = vst [vmem:[%s85] ss:$4 sm:$0xff] %v81
    %v87 = vld.sshfl [vmem:[#allocation1] sm:$0xff pattern:$0x73625140]
    %v88 = vld.sshfl [vmem:[#allocation1 + $0x8] sm:$0xff pattern:$0x73625140]
    %v89 = vld.sshfl [vmem:[#allocation1 + $0x10] sm:$0xff pattern:$0x73625140]
    %v90 = vld.sshfl [vmem:[#allocation1 + $0x18] sm:$0xff pattern:$0x73625140]
    %v91 = vld.sshfl [vmem:[#allocation1 + $0x20] sm:$0xff pattern:$0x73625140]
    %v92 = vld.sshfl [vmem:[#allocation1 + $0x28] sm:$0xff pattern:$0x73625140]
    %v93 = vld.sshfl [vmem:[#allocation1 + $0x30] sm:$0xff pattern:$0x73625140]
    %v94 = vld.sshfl [vmem:[#allocation1 + $0x38] sm:$0xff pattern:$0x73625140]
    %v103 = vpack.c.bf16 %v87, %v87
    %v104 = vpack.c.bf16 %v88, %v88
    %v105 = vpack.c.bf16 %v89, %v89
    %v106 = vpack.c.bf16 %v90, %v90
    %v107 = vpack.c.bf16 %v91, %v91
    %v108 = vpack.c.bf16 %v92, %v92
    %v109 = vpack.c.bf16 %v93, %v93
    %v110 = vpack.c.bf16 %v94, %v94
    %v111 = vld [vmem:[#allocation5] sm:$0xff]
    %v112 = vld [vmem:[#allocation5 + $0x8] sm:$0xff]
    %v113 = vld [vmem:[#allocation5 + $0x10] sm:$0xff]
    %v114 = vld [vmem:[#allocation5 + $0x18] sm:$0xff]
    %v115 = vld [vmem:[#allocation5 + $0x20] sm:$0xff]
    %v116 = vld [vmem:[#allocation5 + $0x28] sm:$0xff]
    %v117 = vld [vmem:[#allocation5 + $0x30] sm:$0xff]
    %v118 = vld [vmem:[#allocation5 + $0x38] sm:$0xff]
    %v119 = vld [vmem:[#allocation5 + $0x40] sm:$0xff]
    %v120 = vld [vmem:[#allocation5 + $0x48] sm:$0xff]
    %v121 = vld [vmem:[#allocation5 + $0x50] sm:$0xff]
    %v122 = vld [vmem:[#allocation5 + $0x58] sm:$0xff]
    %v123 = vld [vmem:[#allocation5 + $0x60] sm:$0xff]
    %v124 = vld [vmem:[#allocation5 + $0x68] sm:$0xff]
    %v125 = vld [vmem:[#allocation5 + $0x70] sm:$0xff]
    %v126 = vld [vmem:[#allocation5 + $0x78] sm:$0xff]
    %v127 = vld [vmem:[#allocation5 + $0x80] sm:$0xff]
    %v128 = vld [vmem:[#allocation5 + $0x88] sm:$0xff]
    %v129 = vld [vmem:[#allocation5 + $0x90] sm:$0xff]
    %v130 = vld [vmem:[#allocation5 + $0x98] sm:$0xff]
    %v131 = vld [vmem:[#allocation5 + $0xa0] sm:$0xff]
    %v132 = vld [vmem:[#allocation5 + $0xa8] sm:$0xff]
    %v133 = vld [vmem:[#allocation5 + $0xb0] sm:$0xff]
    %v134 = vld [vmem:[#allocation5 + $0xb8] sm:$0xff]
    %v135 = vld [vmem:[#allocation5 + $0xc0] sm:$0xff]
    %v136 = vld [vmem:[#allocation5 + $0xc8] sm:$0xff]
    %v137 = vld [vmem:[#allocation5 + $0xd0] sm:$0xff]
    %v138 = vld [vmem:[#allocation5 + $0xd8] sm:$0xff]
    %v139 = vld [vmem:[#allocation5 + $0xe0] sm:$0xff]
    %v140 = vld [vmem:[#allocation5 + $0xe8] sm:$0xff]
    %v141 = vld [vmem:[#allocation5 + $0xf0] sm:$0xff]
    %v142 = vld [vmem:[#allocation5 + $0xf8] sm:$0xff]
    %v143 = vld [vmem:[#allocation5 + $0x100] sm:$0xff]
    %v144 = vld [vmem:[#allocation5 + $0x108] sm:$0xff]
    %v145 = vld [vmem:[#allocation5 + $0x110] sm:$0xff]
    %v146 = vld [vmem:[#allocation5 + $0x118] sm:$0xff]
    %v147 = vld [vmem:[#allocation5 + $0x120] sm:$0xff]
    %v148 = vld [vmem:[#allocation5 + $0x128] sm:$0xff]
    %v149 = vld [vmem:[#allocation5 + $0x130] sm:$0xff]
    %v150 = vld [vmem:[#allocation5 + $0x138] sm:$0xff]
    %v151 = vld [vmem:[#allocation5 + $0x140] sm:$0xff]
    %v152 = vld [vmem:[#allocation5 + $0x148] sm:$0xff]
    %v153 = vld [vmem:[#allocation5 + $0x150] sm:$0xff]
    %v154 = vld [vmem:[#allocation5 + $0x158] sm:$0xff]
    %v155 = vld [vmem:[#allocation5 + $0x160] sm:$0xff]
    %v156 = vld [vmem:[#allocation5 + $0x168] sm:$0xff]
    %v157 = vld [vmem:[#allocation5 + $0x170] sm:$0xff]
    %v158 = vld [vmem:[#allocation5 + $0x178] sm:$0xff]
    %v159 = vld [vmem:[#allocation5 + $0x180] sm:$0xff]
    %v160 = vld [vmem:[#allocation5 + $0x188] sm:$0xff]
    %v161 = vld [vmem:[#allocation5 + $0x190] sm:$0xff]
    %v162 = vld [vmem:[#allocation5 + $0x198] sm:$0xff]
    %v163 = vld [vmem:[#allocation5 + $0x1a0] sm:$0xff]
    %v164 = vld [vmem:[#allocation5 + $0x1a8] sm:$0xff]
    %v165 = vld [vmem:[#allocation5 + $0x1b0] sm:$0xff]
    %v166 = vld [vmem:[#allocation5 + $0x1b8] sm:$0xff]
    %v167 = vld [vmem:[#allocation5 + $0x1c0] sm:$0xff]
    %v168 = vld [vmem:[#allocation5 + $0x1c8] sm:$0xff]
    %v169 = vld [vmem:[#allocation5 + $0x1d0] sm:$0xff]
    %v170 = vld [vmem:[#allocation5 + $0x1d8] sm:$0xff]
    %v171 = vld [vmem:[#allocation5 + $0x1e0] sm:$0xff]
    %v172 = vld [vmem:[#allocation5 + $0x1e8] sm:$0xff]
    %v173 = vld [vmem:[#allocation5 + $0x1f0] sm:$0xff]
    %v174 = vld [vmem:[#allocation5 + $0x1f8] sm:$0xff]
    %v175 = vld [vmem:[#allocation5 + $0x200] sm:$0xff]
    %v176 = vld [vmem:[#allocation5 + $0x208] sm:$0xff]
    %v177 = vld [vmem:[#allocation5 + $0x210] sm:$0xff]
    %v178 = vld [vmem:[#allocation5 + $0x218] sm:$0xff]
    %v179 = vld [vmem:[#allocation5 + $0x220] sm:$0xff]
    %v180 = vld [vmem:[#allocation5 + $0x228] sm:$0xff]
    %v181 = vld [vmem:[#allocation5 + $0x230] sm:$0xff]
    %v182 = vld [vmem:[#allocation5 + $0x238] sm:$0xff]
    %v183 = vld [vmem:[#allocation5 + $0x240] sm:$0xff]
    %v184 = vld [vmem:[#allocation5 + $0x248] sm:$0xff]
    %v185 = vld [vmem:[#allocation5 + $0x250] sm:$0xff]
    %v186 = vld [vmem:[#allocation5 + $0x258] sm:$0xff]
    %v187 = vld [vmem:[#allocation5 + $0x260] sm:$0xff]
    %v188 = vld [vmem:[#allocation5 + $0x268] sm:$0xff]
    %v189 = vld [vmem:[#allocation5 + $0x270] sm:$0xff]
    %v190 = vld [vmem:[#allocation5 + $0x278] sm:$0xff]
    %v191 = vld [vmem:[#allocation5 + $0x280] sm:$0xff]
    %v192 = vld [vmem:[#allocation5 + $0x288] sm:$0xff]
    %v193 = vld [vmem:[#allocation5 + $0x290] sm:$0xff]
    %v194 = vld [vmem:[#allocation5 + $0x298] sm:$0xff]
    %v195 = vld [vmem:[#allocation5 + $0x2a0] sm:$0xff]
    %v196 = vld [vmem:[#allocation5 + $0x2a8] sm:$0xff]
    %v197 = vld [vmem:[#allocation5 + $0x2b0] sm:$0xff]
    %v198 = vld [vmem:[#allocation5 + $0x2b8] sm:$0xff]
    %v199 = vld [vmem:[#allocation5 + $0x2c0] sm:$0xff]
    %v200 = vld [vmem:[#allocation5 + $0x2c8] sm:$0xff]
    %v201 = vld [vmem:[#allocation5 + $0x2d0] sm:$0xff]
    %v202 = vld [vmem:[#allocation5 + $0x2d8] sm:$0xff]
    %v203 = vld [vmem:[#allocation5 + $0x2e0] sm:$0xff]
    %v204 = vld [vmem:[#allocation5 + $0x2e8] sm:$0xff]
    %v205 = vld [vmem:[#allocation5 + $0x2f0] sm:$0xff]
    %v206 = vld [vmem:[#allocation5 + $0x2f8] sm:$0xff]
    %v207 = vld [vmem:[#allocation5 + $0x300] sm:$0xff]
    %v208 = vld [vmem:[#allocation5 + $0x308] sm:$0xff]
    %v209 = vld [vmem:[#allocation5 + $0x310] sm:$0xff]
    %v210 = vld [vmem:[#allocation5 + $0x318] sm:$0xff]
    %v211 = vld [vmem:[#allocation5 + $0x320] sm:$0xff]
    %v212 = vld [vmem:[#allocation5 + $0x328] sm:$0xff]
    %v213 = vld [vmem:[#allocation5 + $0x330] sm:$0xff]
    %v214 = vld [vmem:[#allocation5 + $0x338] sm:$0xff]
    %v215 = vld [vmem:[#allocation5 + $0x340] sm:$0xff]
    %v216 = vld [vmem:[#allocation5 + $0x348] sm:$0xff]
    %v217 = vld [vmem:[#allocation5 + $0x350] sm:$0xff]
    %v218 = vld [vmem:[#allocation5 + $0x358] sm:$0xff]
    %v219 = vld [vmem:[#allocation5 + $0x360] sm:$0xff]
    %v220 = vld [vmem:[#allocation5 + $0x368] sm:$0xff]
    %v221 = vld [vmem:[#allocation5 + $0x370] sm:$0xff]
    %v222 = vld [vmem:[#allocation5 + $0x378] sm:$0xff]
    %v223 = vld [vmem:[#allocation5 + $0x380] sm:$0xff]
    %v224 = vld [vmem:[#allocation5 + $0x388] sm:$0xff]
    %v225 = vld [vmem:[#allocation5 + $0x390] sm:$0xff]
    %v226 = vld [vmem:[#allocation5 + $0x398] sm:$0xff]
    %v227 = vld [vmem:[#allocation5 + $0x3a0] sm:$0xff]
    %v228 = vld [vmem:[#allocation5 + $0x3a8] sm:$0xff]
    %v229 = vld [vmem:[#allocation5 + $0x3b0] sm:$0xff]
    %v230 = vld [vmem:[#allocation5 + $0x3b8] sm:$0xff]
    %v231 = vld [vmem:[#allocation5 + $0x3c0] sm:$0xff]
    %v232 = vld [vmem:[#allocation5 + $0x3c8] sm:$0xff]
    %v233 = vld [vmem:[#allocation5 + $0x3d0] sm:$0xff]
    %v234 = vld [vmem:[#allocation5 + $0x3d8] sm:$0xff]
    %v235 = vld [vmem:[#allocation5 + $0x3e0] sm:$0xff]
    %v236 = vld [vmem:[#allocation5 + $0x3e8] sm:$0xff]
    %v237 = vld [vmem:[#allocation5 + $0x3f0] sm:$0xff]
    %v238 = vld [vmem:[#allocation5 + $0x3f8] sm:$0xff]
    %v239 = vld [vmem:[#allocation7] sm:$0x3]
    %v241 = vperm.slane %v239, 0
    %v242 = vperm.slane %v239, 1
    %v373 = vunpack.c.l.b16 %v111
    %v374 = vunpack.c.h.b16 %v111
    %v375 = vunpack.c.l.b16 %v112
    %v376 = vunpack.c.h.b16 %v112
    %v377 = vunpack.c.l.b16 %v113
    %v378 = vunpack.c.h.b16 %v113
    %v379 = vunpack.c.l.b16 %v114
    %v380 = vunpack.c.h.b16 %v114
    %v381 = vunpack.c.l.b16 %v115
    %v382 = vunpack.c.h.b16 %v115
    %v383 = vunpack.c.l.b16 %v116
    %v384 = vunpack.c.h.b16 %v116
    %v385 = vunpack.c.l.b16 %v117
    %v386 = vunpack.c.h.b16 %v117
    %v387 = vunpack.c.l.b16 %v118
    %v388 = vunpack.c.h.b16 %v118
    %v389 = vunpack.c.l.b16 %v119
    %v390 = vunpack.c.h.b16 %v119
    %v391 = vunpack.c.l.b16 %v120
    %v392 = vunpack.c.h.b16 %v120
    %v393 = vunpack.c.l.b16 %v121
    %v394 = vunpack.c.h.b16 %v121
    %v395 = vunpack.c.l.b16 %v122
    %v396 = vunpack.c.h.b16 %v122
    %v397 = vunpack.c.l.b16 %v123
    %v398 = vunpack.c.h.b16 %v123
    %v399 = vunpack.c.l.b16 %v124
    %v400 = vunpack.c.h.b16 %v124
    %v401 = vunpack.c.l.b16 %v125
    %v402 = vunpack.c.h.b16 %v125
    %v403 = vunpack.c.l.b16 %v126
    %v404 = vunpack.c.h.b16 %v126
    %v405 = vunpack.c.l.b16 %v127
    %v406 = vunpack.c.h.b16 %v127
    %v407 = vunpack.c.l.b16 %v128
    %v408 = vunpack.c.h.b16 %v128
    %v409 = vunpack.c.l.b16 %v129
    %v410 = vunpack.c.h.b16 %v129
    %v411 = vunpack.c.l.b16 %v130
    %v412 = vunpack.c.h.b16 %v130
    %v413 = vunpack.c.l.b16 %v131
    %v414 = vunpack.c.h.b16 %v131
    %v415 = vunpack.c.l.b16 %v132
    %v416 = vunpack.c.h.b16 %v132
    %v417 = vunpack.c.l.b16 %v133
    %v418 = vunpack.c.h.b16 %v133
    %v419 = vunpack.c.l.b16 %v134
    %v420 = vunpack.c.h.b16 %v134
    %v421 = vunpack.c.l.b16 %v135
    %v422 = vunpack.c.h.b16 %v135
    %v423 = vunpack.c.l.b16 %v136
    %v424 = vunpack.c.h.b16 %v136
    %v425 = vunpack.c.l.b16 %v137
    %v426 = vunpack.c.h.b16 %v137
    %v427 = vunpack.c.l.b16 %v138
    %v428 = vunpack.c.h.b16 %v138
    %v429 = vunpack.c.l.b16 %v139
    %v430 = vunpack.c.h.b16 %v139
    %v431 = vunpack.c.l.b16 %v140
    %v432 = vunpack.c.h.b16 %v140
    %v433 = vunpack.c.l.b16 %v141
    %v434 = vunpack.c.h.b16 %v141
    %v435 = vunpack.c.l.b16 %v142
    %v436 = vunpack.c.h.b16 %v142
    %v437 = vunpack.c.l.b16 %v143
    %v438 = vunpack.c.h.b16 %v143
    %v439 = vunpack.c.l.b16 %v144
    %v440 = vunpack.c.h.b16 %v144
    %v441 = vunpack.c.l.b16 %v145
    %v442 = vunpack.c.h.b16 %v145
    %v443 = vunpack.c.l.b16 %v146
    %v444 = vunpack.c.h.b16 %v146
    %v445 = vunpack.c.l.b16 %v147
    %v446 = vunpack.c.h.b16 %v147
    %v447 = vunpack.c.l.b16 %v148
    %v448 = vunpack.c.h.b16 %v148
    %v449 = vunpack.c.l.b16 %v149
    %v450 = vunpack.c.h.b16 %v149
    %v451 = vunpack.c.l.b16 %v150
    %v452 = vunpack.c.h.b16 %v150
    %v453 = vunpack.c.l.b16 %v151
    %v454 = vunpack.c.h.b16 %v151
    %v455 = vunpack.c.l.b16 %v152
    %v456 = vunpack.c.h.b16 %v152
    %v457 = vunpack.c.l.b16 %v153
    %v458 = vunpack.c.h.b16 %v153
    %v459 = vunpack.c.l.b16 %v154
    %v460 = vunpack.c.h.b16 %v154
    %v461 = vunpack.c.l.b16 %v155
    %v462 = vunpack.c.h.b16 %v155
    %v463 = vunpack.c.l.b16 %v156
    %v464 = vunpack.c.h.b16 %v156
    %v465 = vunpack.c.l.b16 %v157
    %v466 = vunpack.c.h.b16 %v157
    %v467 = vunpack.c.l.b16 %v158
    %v468 = vunpack.c.h.b16 %v158
    %v469 = vunpack.c.l.b16 %v159
    %v470 = vunpack.c.h.b16 %v159
    %v471 = vunpack.c.l.b16 %v160
    %v472 = vunpack.c.h.b16 %v160
    %v473 = vunpack.c.l.b16 %v161
    %v474 = vunpack.c.h.b16 %v161
    %v475 = vunpack.c.l.b16 %v162
    %v476 = vunpack.c.h.b16 %v162
    %v477 = vunpack.c.l.b16 %v163
    %v478 = vunpack.c.h.b16 %v163
    %v479 = vunpack.c.l.b16 %v164
    %v480 = vunpack.c.h.b16 %v164
    %v481 = vunpack.c.l.b16 %v165
    %v482 = vunpack.c.h.b16 %v165
    %v483 = vunpack.c.l.b16 %v166
    %v484 = vunpack.c.h.b16 %v166
    %v485 = vunpack.c.l.b16 %v167
    %v486 = vunpack.c.h.b16 %v167
    %v487 = vunpack.c.l.b16 %v168
    %v488 = vunpack.c.h.b16 %v168
    %v489 = vunpack.c.l.b16 %v169
    %v490 = vunpack.c.h.b16 %v169
    %v491 = vunpack.c.l.b16 %v170
    %v492 = vunpack.c.h.b16 %v170
    %v493 = vunpack.c.l.b16 %v171
    %v494 = vunpack.c.h.b16 %v171
    %v495 = vunpack.c.l.b16 %v172
    %v496 = vunpack.c.h.b16 %v172
    %v497 = vunpack.c.l.b16 %v173
    %v498 = vunpack.c.h.b16 %v173
    %v499 = vunpack.c.l.b16 %v174
    %v500 = vunpack.c.h.b16 %v174
    %v501 = vunpack.c.l.b16 %v175
    %v502 = vunpack.c.h.b16 %v175
    %v503 = vunpack.c.l.b16 %v176
    %v504 = vunpack.c.h.b16 %v176
    %v505 = vunpack.c.l.b16 %v177
    %v506 = vunpack.c.h.b16 %v177
    %v507 = vunpack.c.l.b16 %v178
    %v508 = vunpack.c.h.b16 %v178
    %v509 = vunpack.c.l.b16 %v179
    %v510 = vunpack.c.h.b16 %v179
    %v511 = vunpack.c.l.b16 %v180
    %v512 = vunpack.c.h.b16 %v180
    %v513 = vunpack.c.l.b16 %v181
    %v514 = vunpack.c.h.b16 %v181
    %v515 = vunpack.c.l.b16 %v182
    %v516 = vunpack.c.h.b16 %v182
    %v517 = vunpack.c.l.b16 %v183
    %v518 = vunpack.c.h.b16 %v183
    %v519 = vunpack.c.l.b16 %v184
    %v520 = vunpack.c.h.b16 %v184
    %v521 = vunpack.c.l.b16 %v185
    %v522 = vunpack.c.h.b16 %v185
    %v523 = vunpack.c.l.b16 %v186
    %v524 = vunpack.c.h.b16 %v186
    %v525 = vunpack.c.l.b16 %v187
    %v526 = vunpack.c.h.b16 %v187
    %v527 = vunpack.c.l.b16 %v188
    %v528 = vunpack.c.h.b16 %v188
    %v529 = vunpack.c.l.b16 %v189
    %v530 = vunpack.c.h.b16 %v189
    %v531 = vunpack.c.l.b16 %v190
    %v532 = vunpack.c.h.b16 %v190
    %v533 = vunpack.c.l.b16 %v191
    %v534 = vunpack.c.h.b16 %v191
    %v535 = vunpack.c.l.b16 %v192
    %v536 = vunpack.c.h.b16 %v192
    %v537 = vunpack.c.l.b16 %v193
    %v538 = vunpack.c.h.b16 %v193
    %v539 = vunpack.c.l.b16 %v194
    %v540 = vunpack.c.h.b16 %v194
    %v541 = vunpack.c.l.b16 %v195
    %v542 = vunpack.c.h.b16 %v195
    %v543 = vunpack.c.l.b16 %v196
    %v544 = vunpack.c.h.b16 %v196
    %v545 = vunpack.c.l.b16 %v197
    %v546 = vunpack.c.h.b16 %v197
    %v547 = vunpack.c.l.b16 %v198
    %v548 = vunpack.c.h.b16 %v198
    %v549 = vunpack.c.l.b16 %v199
    %v550 = vunpack.c.h.b16 %v199
    %v551 = vunpack.c.l.b16 %v200
    %v552 = vunpack.c.h.b16 %v200
    %v553 = vunpack.c.l.b16 %v201
    %v554 = vunpack.c.h.b16 %v201
    %v555 = vunpack.c.l.b16 %v202
    %v556 = vunpack.c.h.b16 %v202
    %v557 = vunpack.c.l.b16 %v203
    %v558 = vunpack.c.h.b16 %v203
    %v559 = vunpack.c.l.b16 %v204
    %v560 = vunpack.c.h.b16 %v204
    %v561 = vunpack.c.l.b16 %v205
    %v562 = vunpack.c.h.b16 %v205
    %v563 = vunpack.c.l.b16 %v206
    %v564 = vunpack.c.h.b16 %v206
    %v565 = vunpack.c.l.b16 %v207
    %v566 = vunpack.c.h.b16 %v207
    %v567 = vunpack.c.l.b16 %v208
    %v568 = vunpack.c.h.b16 %v208
    %v569 = vunpack.c.l.b16 %v209
    %v570 = vunpack.c.h.b16 %v209
    %v571 = vunpack.c.l.b16 %v210
    %v572 = vunpack.c.h.b16 %v210
    %v573 = vunpack.c.l.b16 %v211
    %v574 = vunpack.c.h.b16 %v211
    %v575 = vunpack.c.l.b16 %v212
    %v576 = vunpack.c.h.b16 %v212
    %v577 = vunpack.c.l.b16 %v213
    %v578 = vunpack.c.h.b16 %v213
    %v579 = vunpack.c.l.b16 %v214
    %v580 = vunpack.c.h.b16 %v214
    %v581 = vunpack.c.l.b16 %v215
    %v582 = vunpack.c.h.b16 %v215
    %v583 = vunpack.c.l.b16 %v216
    %v584 = vunpack.c.h.b16 %v216
    %v585 = vunpack.c.l.b16 %v217
    %v586 = vunpack.c.h.b16 %v217
    %v587 = vunpack.c.l.b16 %v218
    %v588 = vunpack.c.h.b16 %v218
    %v589 = vunpack.c.l.b16 %v219
    %v590 = vunpack.c.h.b16 %v219
    %v591 = vunpack.c.l.b16 %v220
    %v592 = vunpack.c.h.b16 %v220
    %v593 = vunpack.c.l.b16 %v221
    %v594 = vunpack.c.h.b16 %v221
    %v595 = vunpack.c.l.b16 %v222
    %v596 = vunpack.c.h.b16 %v222
    %v597 = vunpack.c.l.b16 %v223
    %v598 = vunpack.c.h.b16 %v223
    %v599 = vunpack.c.l.b16 %v224
    %v600 = vunpack.c.h.b16 %v224
    %v601 = vunpack.c.l.b16 %v225
    %v602 = vunpack.c.h.b16 %v225
    %v603 = vunpack.c.l.b16 %v226
    %v604 = vunpack.c.h.b16 %v226
    %v605 = vunpack.c.l.b16 %v227
    %v606 = vunpack.c.h.b16 %v227
    %v607 = vunpack.c.l.b16 %v228
    %v608 = vunpack.c.h.b16 %v228
    %v609 = vunpack.c.l.b16 %v229
    %v610 = vunpack.c.h.b16 %v229
    %v611 = vunpack.c.l.b16 %v230
    %v612 = vunpack.c.h.b16 %v230
    %v613 = vunpack.c.l.b16 %v231
    %v614 = vunpack.c.h.b16 %v231
    %v615 = vunpack.c.l.b16 %v232
    %v616 = vunpack.c.h.b16 %v232
    %v617 = vunpack.c.l.b16 %v233
    %v618 = vunpack.c.h.b16 %v233
    %v619 = vunpack.c.l.b16 %v234
    %v620 = vunpack.c.h.b16 %v234
    %v621 = vunpack.c.l.b16 %v235
    %v622 = vunpack.c.h.b16 %v235
    %v623 = vunpack.c.l.b16 %v236
    %v624 = vunpack.c.h.b16 %v236
    %v625 = vunpack.c.l.b16 %v237
    %v626 = vunpack.c.h.b16 %v237
    %v627 = vunpack.c.l.b16 %v238
    %v628 = vunpack.c.h.b16 %v238
    %v629 = vpack.c.b16 %v375, %v373
    %v630 = vpack.c.b16 %v376, %v374
    %v631 = vpack.c.b16 %v379, %v377
    %v632 = vpack.c.b16 %v380, %v378
    %v633 = vpack.c.b16 %v383, %v381
    %v634 = vpack.c.b16 %v384, %v382
    %v635 = vpack.c.b16 %v387, %v385
    %v636 = vpack.c.b16 %v388, %v386
    %v637 = vpack.c.b16 %v391, %v389
    %v638 = vpack.c.b16 %v392, %v390
    %v639 = vpack.c.b16 %v395, %v393
    %v640 = vpack.c.b16 %v396, %v394
    %v641 = vpack.c.b16 %v399, %v397
    %v642 = vpack.c.b16 %v400, %v398
    %v643 = vpack.c.b16 %v403, %v401
    %v644 = vpack.c.b16 %v404, %v402
    %v645 = vpack.c.b16 %v407, %v405
    %v646 = vpack.c.b16 %v408, %v406
    %v647 = vpack.c.b16 %v411, %v409
    %v648 = vpack.c.b16 %v412, %v410
    %v649 = vpack.c.b16 %v415, %v413
    %v650 = vpack.c.b16 %v416, %v414
    %v651 = vpack.c.b16 %v419, %v417
    %v652 = vpack.c.b16 %v420, %v418
    %v653 = vpack.c.b16 %v423, %v421
    %v654 = vpack.c.b16 %v424, %v422
    %v655 = vpack.c.b16 %v427, %v425
    %v656 = vpack.c.b16 %v428, %v426
    %v657 = vpack.c.b16 %v431, %v429
    %v658 = vpack.c.b16 %v432, %v430
    %v659 = vpack.c.b16 %v435, %v433
    %v660 = vpack.c.b16 %v436, %v434
    %v661 = vpack.c.b16 %v439, %v437
    %v662 = vpack.c.b16 %v440, %v438
    %v663 = vpack.c.b16 %v443, %v441
    %v664 = vpack.c.b16 %v444, %v442
    %v665 = vpack.c.b16 %v447, %v445
    %v666 = vpack.c.b16 %v448, %v446
    %v667 = vpack.c.b16 %v451, %v449
    %v668 = vpack.c.b16 %v452, %v450
    %v669 = vpack.c.b16 %v455, %v453
    %v670 = vpack.c.b16 %v456, %v454
    %v671 = vpack.c.b16 %v459, %v457
    %v672 = vpack.c.b16 %v460, %v458
    %v673 = vpack.c.b16 %v463, %v461
    %v674 = vpack.c.b16 %v464, %v462
    %v675 = vpack.c.b16 %v467, %v465
    %v676 = vpack.c.b16 %v468, %v466
    %v677 = vpack.c.b16 %v471, %v469
    %v678 = vpack.c.b16 %v472, %v470
    %v679 = vpack.c.b16 %v475, %v473
    %v680 = vpack.c.b16 %v476, %v474
    %v681 = vpack.c.b16 %v479, %v477
    %v682 = vpack.c.b16 %v480, %v478
    %v683 = vpack.c.b16 %v483, %v481
    %v684 = vpack.c.b16 %v484, %v482
    %v685 = vpack.c.b16 %v487, %v485
    %v686 = vpack.c.b16 %v488, %v486
    %v687 = vpack.c.b16 %v491, %v489
    %v688 = vpack.c.b16 %v492, %v490
    %v689 = vpack.c.b16 %v495, %v493
    %v690 = vpack.c.b16 %v496, %v494
    %v691 = vpack.c.b16 %v499, %v497
    %v692 = vpack.c.b16 %v500, %v498
    %v693 = vpack.c.b16 %v503, %v501
    %v694 = vpack.c.b16 %v504, %v502
    %v695 = vpack.c.b16 %v507, %v505
    %v696 = vpack.c.b16 %v508, %v506
    %v697 = vpack.c.b16 %v511, %v509
    %v698 = vpack.c.b16 %v512, %v510
    %v699 = vpack.c.b16 %v515, %v513
    %v700 = vpack.c.b16 %v516, %v514
    %v701 = vpack.c.b16 %v519, %v517
    %v702 = vpack.c.b16 %v520, %v518
    %v703 = vpack.c.b16 %v523, %v521
    %v704 = vpack.c.b16 %v524, %v522
    %v705 = vpack.c.b16 %v527, %v525
    %v706 = vpack.c.b16 %v528, %v526
    %v707 = vpack.c.b16 %v531, %v529
    %v708 = vpack.c.b16 %v532, %v530
    %v709 = vpack.c.b16 %v535, %v533
    %v710 = vpack.c.b16 %v536, %v534
    %v711 = vpack.c.b16 %v539, %v537
    %v712 = vpack.c.b16 %v540, %v538
    %v713 = vpack.c.b16 %v543, %v541
    %v714 = vpack.c.b16 %v544, %v542
    %v715 = vpack.c.b16 %v547, %v545
    %v716 = vpack.c.b16 %v548, %v546
    %v717 = vpack.c.b16 %v551, %v549
    %v718 = vpack.c.b16 %v552, %v550
    %v719 = vpack.c.b16 %v555, %v553
    %v720 = vpack.c.b16 %v556, %v554
    %v721 = vpack.c.b16 %v559, %v557
    %v722 = vpack.c.b16 %v560, %v558
    %v723 = vpack.c.b16 %v563, %v561
    %v724 = vpack.c.b16 %v564, %v562
    %v725 = vpack.c.b16 %v567, %v565
    %v726 = vpack.c.b16 %v568, %v566
    %v727 = vpack.c.b16 %v571, %v569
    %v728 = vpack.c.b16 %v572, %v570
    %v729 = vpack.c.b16 %v575, %v573
    %v730 = vpack.c.b16 %v576, %v574
    %v731 = vpack.c.b16 %v579, %v577
    %v732 = vpack.c.b16 %v580, %v578
    %v733 = vpack.c.b16 %v583, %v581
    %v734 = vpack.c.b16 %v584, %v582
    %v735 = vpack.c.b16 %v587, %v585
    %v736 = vpack.c.b16 %v588, %v586
    %v737 = vpack.c.b16 %v591, %v589
    %v738 = vpack.c.b16 %v592, %v590
    %v739 = vpack.c.b16 %v595, %v593
    %v740 = vpack.c.b16 %v596, %v594
    %v741 = vpack.c.b16 %v599, %v597
    %v742 = vpack.c.b16 %v600, %v598
    %v743 = vpack.c.b16 %v603, %v601
    %v744 = vpack.c.b16 %v604, %v602
    %v745 = vpack.c.b16 %v607, %v605
    %v746 = vpack.c.b16 %v608, %v606
    %v747 = vpack.c.b16 %v611, %v609
    %v748 = vpack.c.b16 %v612, %v610
    %v749 = vpack.c.b16 %v615, %v613
    %v750 = vpack.c.b16 %v616, %v614
    %v751 = vpack.c.b16 %v619, %v617
    %v752 = vpack.c.b16 %v620, %v618
    %v753 = vpack.c.b16 %v623, %v621
    %v754 = vpack.c.b16 %v624, %v622
    %v755 = vpack.c.b16 %v627, %v625
    %v756 = vpack.c.b16 %v628, %v626
    %885 = vmatpush.bf16.msra.mxu0 %v643
    %886 = vmatpush.bf16.msra.mxu0 %v641
    %887 = vmatpush.bf16.msra.mxu0 %v639
    %888 = vmatpush.bf16.msra.mxu0 %v637
    %889 = vmatpush.bf16.msra.mxu0 %v635
    %890 = vmatpush.bf16.msra.mxu0 %v633
    %891 = vmatpush.bf16.msra.mxu0 %v631
    %892 = vmatpush.bf16.msra.mxu0 %v629
    %893 = vmatmul.bf16.gmra.mxu0 %v103
    %v894 = vpop.f32.mrf.mxu0
    %v895 = vadd.f32 %v241, %v894
    %v896 = vpop.f32.mrf.mxu0
    %897 = vdwg.mxu0
    %898 = vmatpush.bf16.msra.mxu0 %v659
    %899 = vmatpush.bf16.msra.mxu0 %v657
    %900 = vmatpush.bf16.msra.mxu0 %v655
    %901 = vmatpush.bf16.msra.mxu0 %v653
    %902 = vmatpush.bf16.msra.mxu0 %v651
    %903 = vmatpush.bf16.msra.mxu0 %v649
    %904 = vmatpush.bf16.msra.mxu0 %v647
    %905 = vmatpush.bf16.msra.mxu0 %v645
    %906 = vmatmul.bf16.gmra.mxu0 %v104
    %v907 = vpop.f32.mrf.mxu0
    %v908 = vadd.f32 %v895, %v907
    %v909 = vpop.f32.mrf.mxu0
    %910 = vdwg.mxu0
    %911 = vmatpush.bf16.msra.mxu0 %v675
    %912 = vmatpush.bf16.msra.mxu0 %v673
    %913 = vmatpush.bf16.msra.mxu0 %v671
    %914 = vmatpush.bf16.msra.mxu0 %v669
    %915 = vmatpush.bf16.msra.mxu0 %v667
    %916 = vmatpush.bf16.msra.mxu0 %v665
    %917 = vmatpush.bf16.msra.mxu0 %v663
    %918 = vmatpush.bf16.msra.mxu0 %v661
    %919 = vmatmul.bf16.gmra.mxu0 %v105
    %v920 = vpop.f32.mrf.mxu0
    %v921 = vadd.f32 %v908, %v920
    %v922 = vpop.f32.mrf.mxu0
    %923 = vdwg.mxu0
    %924 = vmatpush.bf16.msra.mxu0 %v691
    %925 = vmatpush.bf16.msra.mxu0 %v689
    %926 = vmatpush.bf16.msra.mxu0 %v687
    %927 = vmatpush.bf16.msra.mxu0 %v685
    %928 = vmatpush.bf16.msra.mxu0 %v683
    %929 = vmatpush.bf16.msra.mxu0 %v681
    %930 = vmatpush.bf16.msra.mxu0 %v679
    %931 = vmatpush.bf16.msra.mxu0 %v677
    %932 = vmatmul.bf16.gmra.mxu0 %v106
    %v933 = vpop.f32.mrf.mxu0
    %v934 = vadd.f32 %v921, %v933
    %v935 = vpop.f32.mrf.mxu0
    %936 = vdwg.mxu0
    %937 = vmatpush.bf16.msra.mxu0 %v707
    %938 = vmatpush.bf16.msra.mxu0 %v705
    %939 = vmatpush.bf16.msra.mxu0 %v703
    %940 = vmatpush.bf16.msra.mxu0 %v701
    %941 = vmatpush.bf16.msra.mxu0 %v699
    %942 = vmatpush.bf16.msra.mxu0 %v697
    %943 = vmatpush.bf16.msra.mxu0 %v695
    %944 = vmatpush.bf16.msra.mxu0 %v693
    %945 = vmatmul.bf16.gmra.mxu0 %v107
    %v946 = vpop.f32.mrf.mxu0
    %v947 = vadd.f32 %v934, %v946
    %v948 = vpop.f32.mrf.mxu0
    %949 = vdwg.mxu0
    %950 = vmatpush.bf16.msra.mxu0 %v723
    %951 = vmatpush.bf16.msra.mxu0 %v721
    %952 = vmatpush.bf16.msra.mxu0 %v719
    %953 = vmatpush.bf16.msra.mxu0 %v717
    %954 = vmatpush.bf16.msra.mxu0 %v715
    %955 = vmatpush.bf16.msra.mxu0 %v713
    %956 = vmatpush.bf16.msra.mxu0 %v711
    %957 = vmatpush.bf16.msra.mxu0 %v709
    %958 = vmatmul.bf16.gmra.mxu0 %v108
    %v959 = vpop.f32.mrf.mxu0
    %v960 = vadd.f32 %v947, %v959
    %v961 = vpop.f32.mrf.mxu0
    %962 = vdwg.mxu0
    %963 = vmatpush.bf16.msra.mxu0 %v739
    %964 = vmatpush.bf16.msra.mxu0 %v737
    %965 = vmatpush.bf16.msra.mxu0 %v735
    %966 = vmatpush.bf16.msra.mxu0 %v733
    %967 = vmatpush.bf16.msra.mxu0 %v731
    %968 = vmatpush.bf16.msra.mxu0 %v729
    %969 = vmatpush.bf16.msra.mxu0 %v727
    %970 = vmatpush.bf16.msra.mxu0 %v725
    %971 = vmatmul.bf16.gmra.mxu0 %v109
    %v972 = vpop.f32.mrf.mxu0
    %v973 = vadd.f32 %v960, %v972
    %v974 = vpop.f32.mrf.mxu0
    %975 = vdwg.mxu0
    %976 = vmatpush.bf16.msra.mxu0 %v755
    %977 = vmatpush.bf16.msra.mxu0 %v753
    %978 = vmatpush.bf16.msra.mxu0 %v751
    %979 = vmatpush.bf16.msra.mxu0 %v749
    %980 = vmatpush.bf16.msra.mxu0 %v747
    %981 = vmatpush.bf16.msra.mxu0 %v745
    %982 = vmatpush.bf16.msra.mxu0 %v743
    %983 = vmatpush.bf16.msra.mxu0 %v741
    %984 = vmatmul.bf16.gmra.mxu0 %v110
    %v985 = vpop.f32.mrf.mxu0
    %v986 = vadd.f32 %v973, %v985
    %v987 = vpop.f32.mrf.mxu0
    %988 = vdwg.mxu0
    %989 = vmatpush.bf16.msra.mxu0 %v644
    %990 = vmatpush.bf16.msra.mxu0 %v642
    %991 = vmatpush.bf16.msra.mxu0 %v640
    %992 = vmatpush.bf16.msra.mxu0 %v638
    %993 = vmatpush.bf16.msra.mxu0 %v636
    %994 = vmatpush.bf16.msra.mxu0 %v634
    %995 = vmatpush.bf16.msra.mxu0 %v632
    %996 = vmatpush.bf16.msra.mxu0 %v630
    %997 = vmatmul.bf16.gmra.mxu0 %v103
    %v998 = vpop.f32.mrf.mxu0
    %v999 = vadd.f32 %v242, %v998
    %v1000 = vpop.f32.mrf.mxu0
    %1001 = vdwg.mxu0
    %1002 = vmatpush.bf16.msra.mxu0 %v660
    %1003 = vmatpush.bf16.msra.mxu0 %v658
    %1004 = vmatpush.bf16.msra.mxu0 %v656
    %1005 = vmatpush.bf16.msra.mxu0 %v654
    %1006 = vmatpush.bf16.msra.mxu0 %v652
    %1007 = vmatpush.bf16.msra.mxu0 %v650
    %1008 = vmatpush.bf16.msra.mxu0 %v648
    %1009 = vmatpush.bf16.msra.mxu0 %v646
    %1010 = vmatmul.bf16.gmra.mxu0 %v104
    %v1011 = vpop.f32.mrf.mxu0
    %v1012 = vadd.f32 %v999, %v1011
    %v1013 = vpop.f32.mrf.mxu0
    %1014 = vdwg.mxu0
    %1015 = vmatpush.bf16.msra.mxu0 %v676
    %1016 = vmatpush.bf16.msra.mxu0 %v674
    %1017 = vmatpush.bf16.msra.mxu0 %v672
    %1018 = vmatpush.bf16.msra.mxu0 %v670
    %1019 = vmatpush.bf16.msra.mxu0 %v668
    %1020 = vmatpush.bf16.msra.mxu0 %v666
    %1021 = vmatpush.bf16.msra.mxu0 %v664
    %1022 = vmatpush.bf16.msra.mxu0 %v662
    %1023 = vmatmul.bf16.gmra.mxu0 %v105
    %v1024 = vpop.f32.mrf.mxu0
    %v1025 = vadd.f32 %v1012, %v1024
    %v1026 = vpop.f32.mrf.mxu0
    %1027 = vdwg.mxu0
    %1028 = vmatpush.bf16.msra.mxu0 %v692
    %1029 = vmatpush.bf16.msra.mxu0 %v690
    %1030 = vmatpush.bf16.msra.mxu0 %v688
    %1031 = vmatpush.bf16.msra.mxu0 %v686
    %1032 = vmatpush.bf16.msra.mxu0 %v684
    %1033 = vmatpush.bf16.msra.mxu0 %v682
    %1034 = vmatpush.bf16.msra.mxu0 %v680
    %1035 = vmatpush.bf16.msra.mxu0 %v678
    %1036 = vmatmul.bf16.gmra.mxu0 %v106
    %v1037 = vpop.f32.mrf.mxu0
    %v1038 = vadd.f32 %v1025, %v1037
    %v1039 = vpop.f32.mrf.mxu0
    %1040 = vdwg.mxu0
    %1041 = vmatpush.bf16.msra.mxu0 %v708
    %1042 = vmatpush.bf16.msra.mxu0 %v706
    %1043 = vmatpush.bf16.msra.mxu0 %v704
    %1044 = vmatpush.bf16.msra.mxu0 %v702
    %1045 = vmatpush.bf16.msra.mxu0 %v700
    %1046 = vmatpush.bf16.msra.mxu0 %v698
    %1047 = vmatpush.bf16.msra.mxu0 %v696
    %1048 = vmatpush.bf16.msra.mxu0 %v694
    %1049 = vmatmul.bf16.gmra.mxu0 %v107
    %v1050 = vpop.f32.mrf.mxu0
    %v1051 = vadd.f32 %v1038, %v1050
    %v1052 = vpop.f32.mrf.mxu0
    %1053 = vdwg.mxu0
    %1054 = vmatpush.bf16.msra.mxu0 %v724
    %1055 = vmatpush.bf16.msra.mxu0 %v722
    %1056 = vmatpush.bf16.msra.mxu0 %v720
    %1057 = vmatpush.bf16.msra.mxu0 %v718
    %1058 = vmatpush.bf16.msra.mxu0 %v716
    %1059 = vmatpush.bf16.msra.mxu0 %v714
    %1060 = vmatpush.bf16.msra.mxu0 %v712
    %1061 = vmatpush.bf16.msra.mxu0 %v710
    %1062 = vmatmul.bf16.gmra.mxu0 %v108
    %v1063 = vpop.f32.mrf.mxu0
    %v1064 = vadd.f32 %v1051, %v1063
    %v1065 = vpop.f32.mrf.mxu0
    %1066 = vdwg.mxu0
    %1067 = vmatpush.bf16.msra.mxu0 %v740
    %1068 = vmatpush.bf16.msra.mxu0 %v738
    %1069 = vmatpush.bf16.msra.mxu0 %v736
    %1070 = vmatpush.bf16.msra.mxu0 %v734
    %1071 = vmatpush.bf16.msra.mxu0 %v732
    %1072 = vmatpush.bf16.msra.mxu0 %v730
    %1073 = vmatpush.bf16.msra.mxu0 %v728
    %1074 = vmatpush.bf16.msra.mxu0 %v726
    %1075 = vmatmul.bf16.gmra.mxu0 %v109
    %v1076 = vpop.f32.mrf.mxu0
    %v1077 = vadd.f32 %v1064, %v1076
    %v1078 = vpop.f32.mrf.mxu0
    %1079 = vdwg.mxu0
    %1080 = vmatpush.bf16.msra.mxu0 %v756
    %1081 = vmatpush.bf16.msra.mxu0 %v754
    %1082 = vmatpush.bf16.msra.mxu0 %v752
    %1083 = vmatpush.bf16.msra.mxu0 %v750
    %1084 = vmatpush.bf16.msra.mxu0 %v748
    %1085 = vmatpush.bf16.msra.mxu0 %v746
    %1086 = vmatpush.bf16.msra.mxu0 %v744
    %1087 = vmatpush.bf16.msra.mxu0 %v742
    %1088 = vmatmul.bf16.gmra.mxu0 %v110
    %v1089 = vpop.f32.mrf.mxu0
    %v1090 = vadd.f32 %v1077, %v1089
    %v1091 = vpop.f32.mrf.mxu0
    %1092 = vdwg.mxu0
    %v1093 = vmax.f32 %v986, 0.0
    %v1094 = vmax.f32 %v1090, 0.0
    %v1095 = vld [vmem:[#allocation8] sm:$0xf]
    %v1096 = vld [vmem:[#allocation8 + $0x4] sm:$0xf]
    %v1097 = vld [vmem:[#allocation8 + $0x8] sm:$0xf]
    %v1098 = vld [vmem:[#allocation8 + $0xc] sm:$0xf]
    %v1099 = vld [vmem:[#allocation8 + $0x10] sm:$0xf]
    %v1100 = vld [vmem:[#allocation8 + $0x14] sm:$0xf]
    %v1101 = vld [vmem:[#allocation8 + $0x18] sm:$0xf]
    %v1102 = vld [vmem:[#allocation8 + $0x1c] sm:$0xf]
    %v1103 = vld [vmem:[#allocation8 + $0x20] sm:$0xf]
    %v1104 = vld [vmem:[#allocation8 + $0x24] sm:$0xf]
    %v1105 = vld [vmem:[#allocation8 + $0x28] sm:$0xf]
    %v1106 = vld [vmem:[#allocation8 + $0x2c] sm:$0xf]
    %v1107 = vld [vmem:[#allocation8 + $0x30] sm:$0xf]
    %v1108 = vld [vmem:[#allocation8 + $0x34] sm:$0xf]
    %v1109 = vld [vmem:[#allocation8 + $0x38] sm:$0xf]
    %v1110 = vld [vmem:[#allocation8 + $0x3c] sm:$0xf]
    %v1111 = vld [vmem:[#allocation8 + $0x40] sm:$0xf]
    %v1112 = vld [vmem:[#allocation8 + $0x44] sm:$0xf]
    %v1113 = vld [vmem:[#allocation8 + $0x48] sm:$0xf]
    %v1114 = vld [vmem:[#allocation8 + $0x4c] sm:$0xf]
    %v1115 = vld [vmem:[#allocation8 + $0x50] sm:$0xf]
    %v1116 = vld [vmem:[#allocation8 + $0x54] sm:$0xf]
    %v1117 = vld [vmem:[#allocation8 + $0x58] sm:$0xf]
    %v1118 = vld [vmem:[#allocation8 + $0x5c] sm:$0xf]
    %v1119 = vld [vmem:[#allocation8 + $0x60] sm:$0xf]
    %v1120 = vld [vmem:[#allocation8 + $0x64] sm:$0xf]
    %v1121 = vld [vmem:[#allocation8 + $0x68] sm:$0xf]
    %v1122 = vld [vmem:[#allocation8 + $0x6c] sm:$0xf]
    %v1123 = vld [vmem:[#allocation8 + $0x70] sm:$0xf]
    %v1124 = vld [vmem:[#allocation8 + $0x74] sm:$0xf]
    %v1125 = vld [vmem:[#allocation8 + $0x78] sm:$0xf]
    %v1126 = vld [vmem:[#allocation8 + $0x7c] sm:$0xf]
    %v1127 = vunpack.c.l.bf16 %v1095
    %v1128 = vunpack.c.l.bf16 %v1096
    %v1129 = vunpack.c.l.bf16 %v1097
    %v1130 = vunpack.c.l.bf16 %v1098
    %v1131 = vunpack.c.l.bf16 %v1099
    %v1132 = vunpack.c.l.bf16 %v1100
    %v1133 = vunpack.c.l.bf16 %v1101
    %v1134 = vunpack.c.l.bf16 %v1102
    %v1135 = vunpack.c.l.bf16 %v1103
    %v1136 = vunpack.c.l.bf16 %v1104
    %v1137 = vunpack.c.l.bf16 %v1105
    %v1138 = vunpack.c.l.bf16 %v1106
    %v1139 = vunpack.c.l.bf16 %v1107
    %v1140 = vunpack.c.l.bf16 %v1108
    %v1141 = vunpack.c.l.bf16 %v1109
    %v1142 = vunpack.c.l.bf16 %v1110
    %v1143 = vunpack.c.l.bf16 %v1111
    %v1144 = vunpack.c.l.bf16 %v1112
    %v1145 = vunpack.c.l.bf16 %v1113
    %v1146 = vunpack.c.l.bf16 %v1114
    %v1147 = vunpack.c.l.bf16 %v1115
    %v1148 = vunpack.c.l.bf16 %v1116
    %v1149 = vunpack.c.l.bf16 %v1117
    %v1150 = vunpack.c.l.bf16 %v1118
    %v1151 = vunpack.c.l.bf16 %v1119
    %v1152 = vunpack.c.l.bf16 %v1120
    %v1153 = vunpack.c.l.bf16 %v1121
    %v1154 = vunpack.c.l.bf16 %v1122
    %v1155 = vunpack.c.l.bf16 %v1123
    %v1156 = vunpack.c.l.bf16 %v1124
    %v1157 = vunpack.c.l.bf16 %v1125
    %v1158 = vunpack.c.l.bf16 %v1126
    %v1159 = vld [vmem:[%s4] sm:$0x1]
    %v1161 = vperm.slane %v1159, 0
    %1163 = vmatpush.msra.mxu0 %v1142
    %1164 = vmatpush.msra.mxu0 %v1141
    %1165 = vmatpush.msra.mxu0 %v1140
    %1166 = vmatpush.msra.mxu0 %v1139
    %1167 = vmatpush.msra.mxu0 %v1138
    %1168 = vmatpush.msra.mxu0 %v1137
    %1169 = vmatpush.msra.mxu0 %v1136
    %1170 = vmatpush.msra.mxu0 %v1135
    %1171 = vmatpush.msra.mxu0 %v1134
    %1172 = vmatpush.msra.mxu0 %v1133
    %1173 = vmatpush.msra.mxu0 %v1132
    %1174 = vmatpush.msra.mxu0 %v1131
    %1175 = vmatpush.msra.mxu0 %v1130
    %1176 = vmatpush.msra.mxu0 %v1129
    %1177 = vmatpush.msra.mxu0 %v1128
    %1178 = vmatpush.msra.mxu0 %v1127
    %1179 = vmatmul.f32.gmra.mxu0 %v1093
    %v1180 = vpop.f32.mrf.mxu0
    %v1181 = vadd.f32 %v1161, %v1180
    %1182 = vdwg.mxu0
    %1183 = vmatpush.msra.mxu0 %v1158
    %1184 = vmatpush.msra.mxu0 %v1157
    %1185 = vmatpush.msra.mxu0 %v1156
    %1186 = vmatpush.msra.mxu0 %v1155
    %1187 = vmatpush.msra.mxu0 %v1154
    %1188 = vmatpush.msra.mxu0 %v1153
    %1189 = vmatpush.msra.mxu0 %v1152
    %1190 = vmatpush.msra.mxu0 %v1151
    %1191 = vmatpush.msra.mxu0 %v1150
    %1192 = vmatpush.msra.mxu0 %v1149
    %1193 = vmatpush.msra.mxu0 %v1148
    %1194 = vmatpush.msra.mxu0 %v1147
    %1195 = vmatpush.msra.mxu0 %v1146
    %1196 = vmatpush.msra.mxu0 %v1145
    %1197 = vmatpush.msra.mxu0 %v1144
    %1198 = vmatpush.msra.mxu0 %v1143
    %1199 = vmatmul.f32.gmra.mxu0 %v1094
    %v1200 = vpop.f32.mrf.mxu0
    %v1201 = vadd.f32 %v1181, %v1200
    %1202 = vdwg.mxu0
    %1203 = vst [vmem:[#allocation10] sm:$0x3] %v1201
    // Predicated region
    $region38: #{tpu_custom_call.1} parent=1 // pred_check
      _
    $region39: #{tpu_custom_call.1} parent=1 // pred_check_branch
      %1205 = sbr.rel (0) target = $region41
    $region40: #{tpu_custom_call.1} parent=1 // pred_region
      %1207 = vsyncadd [#allocation4], 0
      %s1209 = sshll.u32 [#allocation10], 4
      %s1210 = int_to_ptr.vmem [resolvable:$true] %s1209
      %s1211 = sshll.u32 %s5, 4
      %s1212 = int_to_ptr.hbm [resolvable:$true] %s1211
      %1214 = dma.vmem_to_hbm [thread:$0]  %s1210, 32, %s1212, [#allocation4]
    $region41: #{tpu_custom_call.1} parent=1 // pred_fallthru
      _
    // Predicated region
    $region42: #{tpu_custom_call.1} parent=1 // pred_check
      _
    $region43: #{tpu_custom_call.1} parent=1 // pred_check_branch
      %1216 = sbr.rel (0) target = $region45
    $region44: #{tpu_custom_call.1} parent=1 // pred_region
      %1218 = dma.done [#allocation4], 32
    $region45: #{tpu_custom_call.1} parent=1 // pred_fallthru
      _
    %1219 = vsyncpa [#allocation3], 1
    %1220 = vsyncpa [#allocation6], 1
    %1221 = vsyncpa [#allocation9], 1
    %1222 = vsyncpa [#allocation4], 1

</llo_original>
